<compile_context>
chip_gen: v6e
topology: v6e:2x2x1
jax: 0.10.0
libtpu: 0.0.40
codegen_flags: <defaults>
</compile_context>

<pallas_src>
import jax
import jax.numpy as jnp
from jax.experimental import pallas as pl
from jax.experimental.pallas import tpu as pltpu


def _lm_head_kernel(x_ref, w_ref, o_ref):
    # x_ref: (Mp, D) slab (resident for every vocab tile)
    # w_ref: (tn, D) weight tile (vocab-major, same layout as nn.Linear.weight)
    # o_ref: (Mp, tn) f32 logits tile
    # Contract hidden dim of both operands -> no transpose / cross-lane shuffle.
    o_ref[...] = jax.lax.dot_general(
        x_ref[...],
        w_ref[...],
        dimension_numbers=(((1,), (1,)), ((), ())),
        preferred_element_type=jnp.float32,
    ).astype(o_ref.dtype)


def _round_up(a: int, b: int) -> int:
    return ((a + b - 1) // b) * b


def lm_head_matmul(x: jax.Array, weight: jax.Array, *, tn: int = 512) -> jax.Array:
    """Compute f32 logits = x @ weight.T with a Pallas kernel tiled over vocab.

    x:      (tokens, hidden)
    weight: (vocab, hidden)   (nn.Linear layout)
    returns (tokens, vocab) float32
    """
    M, D = x.shape
    V, D_w = weight.shape
    assert D == D_w, "hidden dims must match"

    # --- pad tokens to a sublane multiple (8) so the MXU rows are not wasted
    #     on an odd remainder and the output block is a legal (8k, 128k) tile.
    Mp = max(8, _round_up(M, 8))
    if Mp != M:
        x = jnp.pad(x, ((0, Mp - M), (0, 0)))

    # --- vocab tile: multiple of 128 (lane-dense stores), no bigger than vocab.
    tn = max(128, (min(tn, _round_up(V, 128)) // 128) * 128)
    Vp = _round_up(V, tn)
    if Vp != V:
        weight = jnp.pad(weight, ((0, Vp - V), (0, 0)))

    grid = (Vp // tn,)

    # --- explicit VMEM budget: 2x weight tile (double buffer) + 2x x slab
    #     + 2x output tile, with headroom.  Default tn keeps this small enough
    #     for v7x's 64 MiB VMEM; raise tn per-generation if sweeping.
    w_bytes = jnp.dtype(weight.dtype).itemsize
    x_bytes = jnp.dtype(x.dtype).itemsize
    footprint = (
        2 * tn * D * w_bytes      # double-buffered weight stream
        + 2 * Mp * D * x_bytes    # resident x slab (conservatively x2)
        + 2 * Mp * tn * 4         # f32 output tile (conservatively x2)
    )
    vmem_limit = min(max(int(footprint * 1.5), 32 * 1024 * 1024), 96 * 1024 * 1024)

    cost = pl.CostEstimate(
        flops=2 * Mp * Vp * D,
        transcendentals=0,
        bytes_accessed=Vp * D * w_bytes + Mp * D * x_bytes + Mp * Vp * 4,
    )

    out = pl.pallas_call(
        _lm_head_kernel,
        out_shape=jax.ShapeDtypeStruct((Mp, Vp), jnp.float32),
        grid_spec=pltpu.PrefetchScalarGridSpec(
            num_scalar_prefetch=0,
            grid=grid,
            in_specs=[
                # x slab: full (Mp, D), same block for every vocab tile.
                pl.BlockSpec((Mp, D), lambda j: (0, 0)),
                # weight tile: tn vocab rows x full hidden dim, streamed over j.
                pl.BlockSpec((tn, D), lambda j: (j, 0)),
            ],
            out_specs=pl.BlockSpec((Mp, tn), lambda j: (0, j)),
        ),
        compiler_params=pltpu.CompilerParams(
            dimension_semantics=("parallel",),
            vmem_limit_bytes=vmem_limit,
        ),
        cost_estimate=cost,
    )(x, weight)

    # slice away padding
    return out[:M, :V]


def lm_head_forward(x, weight, *, is_prefill=False, cu_seqlens_q=None):
    """Forward pass of LMHead.

    If prefilling with cu_seqlens_q, gather the last hidden state of each
    sequence (plain-JAX glue), then project to vocab logits via Pallas.
    """
    if is_prefill and cu_seqlens_q is not None:
        # TODO(synk): fuse this gather into the kernel via scalar prefetch +
        # pl.Element row index_map; kept as glue since x is tiny vs the weight.
        last_indices = cu_seqlens_q[1:] - 1
        x = jnp.take(x, last_indices, axis=0)
    return lm_head_matmul(x, weight)


if __name__ == "__main__":
    # Small shapes consistent with the module:
    #   total packed tokens T = 8, hidden D = 128, vocab V = 256.
    T, D, V = 8, 128, 256

    key = jax.random.PRNGKey(0)
    kx, kw, kw2 = jax.random.split(key, 3)
    x = jax.random.normal(kx, (T, D), dtype=jnp.float32)
    weight = jax.random.normal(kw, (V, D), dtype=jnp.float32) * 0.02

    # --- decode-style call (no gather) ---
    logits_decode = lm_head_forward(x, weight)
    logits_decode = jax.block_until_ready(logits_decode)

    # --- prefill-style call (gather last token of each sequence) ---
    # two packed sequences of lengths 5 and 3 -> cu_seqlens_q = [0, 5, 8]
    cu_seqlens_q = jnp.array([0, 5, 8], dtype=jnp.int32)
    logits_prefill = lm_head_forward(
        x, weight, is_prefill=True, cu_seqlens_q=cu_seqlens_q
    )
    logits_prefill = jax.block_until_ready(logits_prefill)

    # --- ragged vocab (not a multiple of the tile) exercises the padding path ---
    V_ragged = 200
    weight_ragged = jax.random.normal(kw2, (V_ragged, D), dtype=jnp.float32) * 0.02
    logits_ragged = lm_head_forward(x, weight_ragged)
    logits_ragged = jax.block_until_ready(logits_ragged)

    # reference checks
    ref_decode = x @ weight.T
    last = cu_seqlens_q[1:] - 1
    ref_prefill = x[last] @ weight.T
    ref_ragged = x @ weight_ragged.T

    assert logits_decode.shape == (T, V)
    assert logits_prefill.shape == (2, V)
    assert logits_ragged.shape == (T, V_ragged)
    assert logits_decode.dtype == jnp.float32
    assert jnp.allclose(logits_decode, ref_decode, atol=1e-4, rtol=1e-4)
    assert jnp.allclose(logits_prefill, ref_prefill, atol=1e-4, rtol=1e-4)
    assert jnp.allclose(logits_ragged, ref_ragged, atol=1e-4, rtol=1e-4)

    print("KERNEL_OK")
</pallas_src>

<mosaic_0001>
module attributes {stable_mosaic.version = 11 : i64} {
  func.func @_lm_head_kernel(%arg0: i32, %arg1: memref<8x128xf32, #tpu.memory_space<vmem>>, %arg2: memref<256x128xf32, #tpu.memory_space<vmem>>, %arg3: memref<8x256xf32, #tpu.memory_space<vmem>>) attributes {dimension_semantics = [#tpu.dimension_semantics<parallel>], iteration_bounds = array<i64: 1>, scalar_prefetch = 0 : i64, scratch_operands = 0 : i64, tpu.core_type = #tpu.core_type<tc>, window_params = [{pipeline_mode = #tpu.pipeline_mode<synchronous>, transform_indices = @transform_0, window_bounds = array<i64: 8, 128>}, {transform_indices = @transform_1, window_bounds = array<i64: 256, 128>}, {transform_indices = @transform_2, window_bounds = array<i64: 8, 256>}]} {
    %c0 = arith.constant 0 : index
    %c0_0 = arith.constant 0 : index
    %0 = vector.load %arg1[%c0, %c0_0] : memref<8x128xf32, #tpu.memory_space<vmem>>, vector<8x128xf32>
    %c0_1 = arith.constant 0 : index
    %c0_2 = arith.constant 0 : index
    %1 = vector.load %arg2[%c0_1, %c0_2] : memref<256x128xf32, #tpu.memory_space<vmem>>, vector<256x128xf32>
    %cst = arith.constant dense<0.000000e+00> : vector<8x256xf32>
    %2 = tpu.matmul %0, %1, %cst {dimension_numbers = #tpu.dot_dimension_numbers<[1], [1], [0], [0], [0, 0, 1, 0], [], []>} : vector<8x128xf32>, vector<256x128xf32>, vector<8x256xf32> -> vector<8x256xf32>
    %c0_3 = arith.constant 0 : index
    %c0_4 = arith.constant 0 : index
    %3 = vector.load %arg3[%c0_3, %c0_4] : memref<8x256xf32, #tpu.memory_space<vmem>>, vector<8x256xf32>
    tpu.vector_store %arg3[%c0_3, %c0_4], %2 {strides = array<i32>} : memref<8x256xf32, #tpu.memory_space<vmem>>, vector<8x256xf32>,
    return
  }
  func.func @transform_0(%arg0: i32) -> (i32, i32) {
    %c0_i32 = arith.constant 0 : i32
    %c0_i32_0 = arith.constant 0 : i32
    %c0_i32_1 = arith.constant 0 : i32
    return %c0_i32, %c0_i32_0 : i32, i32
  }
  func.func @transform_1(%arg0: i32) -> (i32, i32) {
    %c0_i32 = arith.constant 0 : i32
    %c0_i32_0 = arith.constant 0 : i32
    return %arg0, %c0_i32 : i32, i32
  }
  func.func @transform_2(%arg0: i32) -> (i32, i32) {
    %c0_i32 = arith.constant 0 : i32
    %c0_i32_0 = arith.constant 0 : i32
    return %c0_i32, %arg0 : i32, i32
  }
}

</mosaic_0001>

<llo_original>
// kernel: tpu_custom_call.1
$region0: #{tpu_custom_call.1}
  #allocation0 [shape = 'u32[]', space=smem, size = 0x4, offset = 0x4, fixed_abs, tag = 'smem constant byte address 0x4 - core index']
  #allocation1 [shape = 'u32[144,128]{1,0:T(1,128)}', space=vmem, size = 0x12000, scoped, tag = 'internal scratch']
  %s0 = inlined_call_operand.hbm [shape: f32[8,128], index: 0, kind: input, shape index: {}]
  %s1 = inlined_call_operand.hbm [shape: f32[256,128], index: 1, kind: input, shape index: {}]
  %s2 = inlined_call_operand.hbm [shape: f32[8,256], index: 2, kind: output, shape index: {}]
  %s3 = sld [smem:[#allocation0]]
  $region26: #{tpu_custom_call.1} parent=0
    _
  %s5 = ssub.s32 1, %s3
  %s6 = scalar_select 0, %s5, %s3
  $region1: #{tpu_custom_call.1} parent=0
    #allocation2 [shape = 'u8[4096]{0}', space=vmem, size = 0x1000, scoped, tag = 'input window, operand 0, single buffered']
    #allocation3 [shape = 's32[1]{0}', space=sflag, size = 0x4, scoped, tag = 'scoped memory for tpu_custom_call.1']
    #allocation4 [shape = 's32[1]{0}', space=sflag, size = 0x4, scoped, tag = 'scoped memory for tpu_custom_call.1']
    #allocation5 [shape = 'u8[131072]{0}', space=vmem, size = 0x20000, scoped, tag = 'input window, operand 1, single buffered']
    #allocation6 [shape = 's32[1]{0}', space=sflag, size = 0x4, scoped, tag = 'scoped memory for tpu_custom_call.1']
    #allocation7 [shape = 'u8[8192]{0}', space=vmem, size = 0x2000, scoped, tag = 'output window, operand 0, single buffered']
    %7 = vsyncpa [#allocation3], 0
    %8 = vsyncpa [#allocation6], 0
    %9 = vsyncpa [#allocation4], 0
    // Predicated region
    $region2: #{tpu_custom_call.1} parent=1 // pred_check
      _
    $region3: #{tpu_custom_call.1} parent=1 // pred_check_branch
      %11 = sbr.rel (0) target = $region5
    $region4: #{tpu_custom_call.1} parent=1 // pred_region
      %s13 = ssub.s32 128, 128
      %14 = vsyncadd [#allocation3], %s13
      %s16 = sshll.u32 [#allocation2], 4
      %s17 = int_to_ptr.vmem [resolvable:$true] %s16
      %19 = dma.hbm_to_vmem [thread:$0]  %s0, 128, %s17, [#allocation3]
    $region5: #{tpu_custom_call.1} parent=1 // pred_fallthru
      _
    // Predicated region
    $region6: #{tpu_custom_call.1} parent=1 // pred_check
      _
    $region7: #{tpu_custom_call.1} parent=1 // pred_check_branch
      %21 = sbr.rel (0) target = $region9
    $region8: #{tpu_custom_call.1} parent=1 // pred_region
      %s23 = ssub.s32 4096, 4096
      %24 = vsyncadd [#allocation6], %s23
      %s25 = sshll.u32 [#allocation5], 4
      %s26 = int_to_ptr.vmem [resolvable:$true] %s25
      %31 = dma.hbm_to_vmem [thread:$0]  %s1, 4096, %s26, [#allocation6], 128, 128, 8
    $region9: #{tpu_custom_call.1} parent=1 // pred_fallthru
      _
    // Predicated region
    $region10: #{tpu_custom_call.1} parent=1 // pred_check
      _
    $region11: #{tpu_custom_call.1} parent=1 // pred_check_branch
      %33 = sbr.rel (0) target = $region13
    $region12: #{tpu_custom_call.1} parent=1 // pred_region
      %34 = dma.done [#allocation3], 128
    $region13: #{tpu_custom_call.1} parent=1 // pred_fallthru
      _
    // Predicated region
    $region14: #{tpu_custom_call.1} parent=1 // pred_check
      _
    $region15: #{tpu_custom_call.1} parent=1 // pred_check_branch
      %36 = sbr.rel (0) target = $region17
    $region16: #{tpu_custom_call.1} parent=1 // pred_region
      %37 = dma.done [#allocation6], 4096
    $region17: #{tpu_custom_call.1} parent=1 // pred_fallthru
      _
    %v38 = vld [vmem:[#allocation2] sm:$0xff]
    %v39 = vld [vmem:[#allocation5] sm:$0xff]
    %v40 = vld [vmem:[#allocation5 + $0x8] sm:$0xff]
    %v41 = vld [vmem:[#allocation5 + $0x10] sm:$0xff]
    %v42 = vld [vmem:[#allocation5 + $0x18] sm:$0xff]
    %v43 = vld [vmem:[#allocation5 + $0x20] sm:$0xff]
    %v44 = vld [vmem:[#allocation5 + $0x28] sm:$0xff]
    %v45 = vld [vmem:[#allocation5 + $0x30] sm:$0xff]
    %v46 = vld [vmem:[#allocation5 + $0x38] sm:$0xff]
    %v47 = vld [vmem:[#allocation5 + $0x40] sm:$0xff]
    %v48 = vld [vmem:[#allocation5 + $0x48] sm:$0xff]
    %v49 = vld [vmem:[#allocation5 + $0x50] sm:$0xff]
    %v50 = vld [vmem:[#allocation5 + $0x58] sm:$0xff]
    %v51 = vld [vmem:[#allocation5 + $0x60] sm:$0xff]
    %v52 = vld [vmem:[#allocation5 + $0x68] sm:$0xff]
    %v53 = vld [vmem:[#allocation5 + $0x70] sm:$0xff]
    %v54 = vld [vmem:[#allocation5 + $0x78] sm:$0xff]
    %v55 = vld [vmem:[#allocation5 + $0x80] sm:$0xff]
    %v56 = vld [vmem:[#allocation5 + $0x88] sm:$0xff]
    %v57 = vld [vmem:[#allocation5 + $0x90] sm:$0xff]
    %v58 = vld [vmem:[#allocation5 + $0x98] sm:$0xff]
    %v59 = vld [vmem:[#allocation5 + $0xa0] sm:$0xff]
    %v60 = vld [vmem:[#allocation5 + $0xa8] sm:$0xff]
    %v61 = vld [vmem:[#allocation5 + $0xb0] sm:$0xff]
    %v62 = vld [vmem:[#allocation5 + $0xb8] sm:$0xff]
    %v63 = vld [vmem:[#allocation5 + $0xc0] sm:$0xff]
    %v64 = vld [vmem:[#allocation5 + $0xc8] sm:$0xff]
    %v65 = vld [vmem:[#allocation5 + $0xd0] sm:$0xff]
    %v66 = vld [vmem:[#allocation5 + $0xd8] sm:$0xff]
    %v67 = vld [vmem:[#allocation5 + $0xe0] sm:$0xff]
    %v68 = vld [vmem:[#allocation5 + $0xe8] sm:$0xff]
    %v69 = vld [vmem:[#allocation5 + $0xf0] sm:$0xff]
    %v70 = vld [vmem:[#allocation5 + $0xf8] sm:$0xff]
    %71 = vmatprep.subr.mxu0 0.0
    %72 = vmatpush1.xpose.msra.mxu0 %v54
    %73 = vmatprep.subr.mxu0 0.0
    %74 = vmatpush1.xpose.msra.mxu0 %v53
    %75 = vmatprep.subr.mxu0 0.0
    %76 = vmatpush1.xpose.msra.mxu0 %v52
    %77 = vmatprep.subr.mxu0 0.0
    %78 = vmatpush1.xpose.msra.mxu0 %v51
    %79 = vmatprep.subr.mxu0 0.0
    %80 = vmatpush1.xpose.msra.mxu0 %v50
    %81 = vmatprep.subr.mxu0 0.0
    %82 = vmatpush1.xpose.msra.mxu0 %v49
    %83 = vmatprep.subr.mxu0 0.0
    %84 = vmatpush1.xpose.msra.mxu0 %v48
    %85 = vmatprep.subr.mxu0 0.0
    %86 = vmatpush1.xpose.msra.mxu0 %v47
    %87 = vmatprep.subr.mxu0 0.0
    %88 = vmatpush1.xpose.msra.mxu0 %v46
    %89 = vmatprep.subr.mxu0 0.0
    %90 = vmatpush1.xpose.msra.mxu0 %v45
    %91 = vmatprep.subr.mxu0 0.0
    %92 = vmatpush1.xpose.msra.mxu0 %v44
    %93 = vmatprep.subr.mxu0 0.0
    %94 = vmatpush1.xpose.msra.mxu0 %v43
    %95 = vmatprep.subr.mxu0 0.0
    %96 = vmatpush1.xpose.msra.mxu0 %v42
    %97 = vmatprep.subr.mxu0 0.0
    %98 = vmatpush1.xpose.msra.mxu0 %v41
    %99 = vmatprep.subr.mxu0 0.0
    %100 = vmatpush1.xpose.msra.mxu0 %v40
    %101 = vmatprep.subr.mxu0 0.0
    %102 = vmatpush1.xpose.msra.mxu0 %v39
    %103 = vmatprep.subr.mxu0 0.0
    %104 = vmatpush2.xpose.msra.mxu0 %v70
    %105 = vmatprep.subr.mxu0 0.0
    %106 = vmatpush2.xpose.msra.mxu0 %v69
    %107 = vmatprep.subr.mxu0 0.0
    %108 = vmatpush2.xpose.msra.mxu0 %v68
    %109 = vmatprep.subr.mxu0 0.0
    %110 = vmatpush2.xpose.msra.mxu0 %v67
    %111 = vmatprep.subr.mxu0 0.0
    %112 = vmatpush2.xpose.msra.mxu0 %v66
    %113 = vmatprep.subr.mxu0 0.0
    %114 = vmatpush2.xpose.msra.mxu0 %v65
    %115 = vmatprep.subr.mxu0 0.0
    %116 = vmatpush2.xpose.msra.mxu0 %v64
    %117 = vmatprep.subr.mxu0 0.0
    %118 = vmatpush2.xpose.msra.mxu0 %v63
    %119 = vmatprep.subr.mxu0 0.0
    %120 = vmatpush2.xpose.msra.mxu0 %v62
    %121 = vmatprep.subr.mxu0 0.0
    %122 = vmatpush2.xpose.msra.mxu0 %v61
    %123 = vmatprep.subr.mxu0 0.0
    %124 = vmatpush2.xpose.msra.mxu0 %v60
    %125 = vmatprep.subr.mxu0 0.0
    %126 = vmatpush2.xpose.msra.mxu0 %v59
    %127 = vmatprep.subr.mxu0 0.0
    %128 = vmatpush2.xpose.msra.mxu0 %v58
    %129 = vmatprep.subr.mxu0 0.0
    %130 = vmatpush2.xpose.msra.mxu0 %v57
    %131 = vmatprep.subr.mxu0 0.0
    %132 = vmatpush2.xpose.msra.mxu0 %v56
    %133 = vmatprep.subr.mxu0 0.0
    %134 = vmatpush2.xpose.msra.mxu0 %v55
    %135 = vmatprep.mubr.f32.mxu0 0.0
    %136 = vmatmul.mubr.f32.gmra.mxu0 %v38
    %v137 = vpop.f32.mrf.mxu0
    %v138 = vadd.f32 0.0, %v137
    %v139 = vpop.f32.mrf.mxu0
    %v140 = vadd.f32 0.0, %v139
    %141 = vdwg.mxu0
    %142 = vst [vmem:[#allocation7] sm:$0xff] %v138
    %143 = vst [vmem:[#allocation7 + $0x8] sm:$0xff] %v140
    // Predicated region
    $region18: #{tpu_custom_call.1} parent=1 // pred_check
      _
    $region19: #{tpu_custom_call.1} parent=1 // pred_check_branch
      %145 = sbr.rel (0) target = $region21
    $region20: #{tpu_custom_call.1} parent=1 // pred_region
      %s147 = ssub.s32 256, 256
      %148 = vsyncadd [#allocation4], %s147
      %s150 = sshll.u32 [#allocation7], 4
      %s151 = int_to_ptr.vmem [resolvable:$true] %s150
      %153 = dma.vmem_to_hbm [thread:$0]  %s151, 256, %s2, [#allocation4]
    $region21: #{tpu_custom_call.1} parent=1 // pred_fallthru
      _
    // Predicated region
    $region22: #{tpu_custom_call.1} parent=1 // pred_check
      _
    $region23: #{tpu_custom_call.1} parent=1 // pred_check_branch
      %155 = sbr.rel (0) target = $region25
    $region24: #{tpu_custom_call.1} parent=1 // pred_region
      %156 = dma.done [#allocation4], 256
    $region25: #{tpu_custom_call.1} parent=1 // pred_fallthru
      _
    %157 = vsyncpa [#allocation3], 1
    %158 = vsyncpa [#allocation6], 1
    %159 = vsyncpa [#allocation4], 1

</llo_original>
